<compile_context>
chip_gen: v6e
topology: v6e:2x2x1
jax: 0.10.0
libtpu: 0.0.40
codegen_flags: <defaults>
</compile_context>

<pallas_src>
import functools

import jax
import jax.numpy as jnp
from jax.experimental import pallas as pl
from jax.experimental.pallas import tpu as pltpu  # noqa: F401  (used when scaling up)

SUBLANE = 8          # sublane tile height
OUT_LANES = 128      # lane-dense output width (logits live in lanes [0:2])
NUM_CLASSES = 2
EXTRA_GATHER_ROWS = SUBLANE  # halo so shifted slices of the last batch block stay in bounds


def charcnn_kernel(ids_ref, table_ref, wconv_ref, bconv_ref, wout_ref, out_ref,
                   *, seq_len, filter_size):
    """Fused embed + conv + ReLU + max-over-time + linear.

    ids_ref   : (B_pad*S + 8, 1) int32   VMEM  flattened token ids (zero padded)
    table_ref : (V, E)           float32 VMEM  embedding table
    wconv_ref : (fs, E, F)       float32 VMEM  Conv2d weight, [k, e, f]
    bconv_ref : (1, F)           float32 VMEM  Conv2d bias
    wout_ref  : (F, 128)         float32 VMEM  Linear weight, transposed + lane-padded
    out_ref   : (B_pad, 128)     float32 VMEM  logits (first 2 lanes valid)
    """
    V, E = table_ref.shape
    F = wconv_ref.shape[2]
    B_pad = out_ref.shape[0]
    S = seq_len
    fs = filter_size
    L = S - fs + 1
    BS = B_pad * S                       # valid conv rows (multiple of 8)
    n_gather = ids_ref.shape[0]
    assert n_gather >= BS + fs - 1

    # ---- embedding gather as ONE one-hot MXU matmul (no scalar loop) --------
    ids = ids_ref[...]                                              # (BS+8, 1)
    vocab_iota = jax.lax.broadcasted_iota(jnp.int32, (n_gather, V), 1)
    one_hot = (vocab_iota == ids).astype(jnp.float32)               # (BS+8, V)
    emb = jnp.dot(one_hot, table_ref[...],
                  preferred_element_type=jnp.float32)               # (BS+8, E)

    # ---- conv as fs accumulated shifted matmuls (no im2col, no concats) -----
    # acc[b*S + t, f] = sum_k sum_e emb[b*S + t + k, e] * W[k, e, f]
    # Rows with t >= L pick up cross-batch / padded rows; they are masked out
    # in the pooling below, so this is harmless.
    acc = jnp.dot(emb[0:BS, :], wconv_ref[0],
                  preferred_element_type=jnp.float32)               # (BS, F)
    for k in range(1, fs):
        acc = acc + jnp.dot(emb[k:k + BS, :], wconv_ref[k],
                            preferred_element_type=jnp.float32)
    relu = jnp.maximum(acc + bconv_ref[...], 0.0)                   # (BS, F)

    # ---- max over time: one aligned (B_pad, S, F) sublane reduction ---------
    # Padded time rows are replaced by 0 post-ReLU (exact: valid outputs >= 0).
    relu3 = relu.reshape(B_pad, S, F)
    t_iota = jax.lax.broadcasted_iota(jnp.int32, (B_pad, S, F), 1)
    pooled = jnp.max(jnp.where(t_iota < L, relu3, 0.0), axis=1)     # (B_pad, F)

    # ---- output linear: single lane-dense + sublane-dense store -------------
    out_ref[...] = jnp.dot(pooled, wout_ref[...],
                           preferred_element_type=jnp.float32)      # (B_pad, 128)


def prepare_params(emb_table, conv_w, conv_b, out_w):
    """One-time parameter re-layout (hoisted out of the per-call path)."""
    F, _, fs, E = conv_w.shape
    # Conv2d weight (F, 1, fs, E) -> (fs, E, F): one clean (E, F) slab per shift.
    wconv = jnp.transpose(conv_w.reshape(F, fs, E), (1, 2, 0)).astype(jnp.float32)
    bconv = conv_b.reshape(1, F).astype(jnp.float32)
    # Linear weight (2, F) -> (F, 128), zero-padded for a lane-dense output store.
    wout = jnp.zeros((F, OUT_LANES), jnp.float32).at[:, :out_w.shape[0]].set(
        jnp.transpose(out_w).astype(jnp.float32))
    return {
        "table": emb_table.astype(jnp.float32),
        "wconv": wconv,
        "bconv": bconv,
        "wout": wout,
    }


def conv_classifier_forward(inputs, params):
    """inputs: (B, S) int32 token ids.  Returns (B, 2) float32 logits."""
    B, S = inputs.shape
    table, wconv, bconv, wout = (params["table"], params["wconv"],
                                 params["bconv"], params["wout"])
    V, E = table.shape
    fs, _, F = wconv.shape

    # Pad batch to a sublane multiple so every store/reduction is aligned, and
    # add a small gather halo so the last batch block's conv window is in bounds.
    B_pad = pl.cdiv(B, SUBLANE) * SUBLANE
    n_gather = B_pad * S + EXTRA_GATHER_ROWS
    ids = jnp.zeros((n_gather, 1), jnp.int32).at[:B * S, 0].set(
        inputs.reshape(-1).astype(jnp.int32))

    kernel = functools.partial(charcnn_kernel, seq_len=S, filter_size=fs)

    # TODO(synk): at scaled shapes add grid=(B_pad // B_tile,) with
    # dimension_semantics=("parallel",), bf16 matmul operands, and
    # vmem_limit_bytes sized for v7x's 64 MiB VMEM.
    out_padded = pl.pallas_call(
        kernel,
        out_shape=jax.ShapeDtypeStruct((B_pad, OUT_LANES), jnp.float32),
        in_specs=[
            pl.BlockSpec((n_gather, 1), lambda: (0, 0)),        # token ids
            pl.BlockSpec((V, E), lambda: (0, 0)),               # emb table
            pl.BlockSpec((fs, E, F), lambda: (0, 0, 0)),        # conv weight
            pl.BlockSpec((1, F), lambda: (0, 0)),               # conv bias
            pl.BlockSpec((F, OUT_LANES), lambda: (0, 0)),       # out weight
        ],
        out_specs=pl.BlockSpec((B_pad, OUT_LANES), lambda: (0, 0)),
    )(ids, table, wconv, bconv, wout)

    return out_padded[:B, :NUM_CLASSES]


def reference_forward(inputs, emb_table, conv_w, conv_b, out_w, fs):
    """Pure-JAX reference mirroring the PyTorch forward exactly."""
    embs = emb_table[inputs]                                  # (B, S, E)
    B, S, E = embs.shape
    F = conv_w.shape[0]
    L = S - fs + 1
    w = conv_w.reshape(F, fs * E)                             # (F, fs*E)
    cols = jnp.stack(
        [embs[:, t:t + fs, :].reshape(B, fs * E) for t in range(L)], axis=1)
    conv = jnp.einsum("blk,fk->bfl", cols, w) + conv_b[None, :, None]  # (B, F, L)
    relu = jnp.maximum(conv, 0.0)
    pooled = relu.max(axis=2)                                 # (B, F)
    return pooled @ out_w.T                                   # (B, 2)


if __name__ == "__main__":
    # Small, module-consistent shapes.
    vocab_size = 20
    emb_dim = 16
    filter_size = 3
    filters_count = 32
    batch = 2
    seq_len = 8

    key = jax.random.PRNGKey(0)
    k_in, k_emb, k_cw, k_cb, k_ow = jax.random.split(key, 5)

    inputs = jax.random.randint(k_in, (batch, seq_len), 0, vocab_size, dtype=jnp.int32)
    emb_table = jax.random.normal(k_emb, (vocab_size, emb_dim), jnp.float32) * 0.1
    conv_w = jax.random.normal(
        k_cw, (filters_count, 1, filter_size, emb_dim), jnp.float32) * 0.1
    conv_b = jax.random.normal(k_cb, (filters_count,), jnp.float32) * 0.1
    out_w = jax.random.normal(k_ow, (2, filters_count), jnp.float32) * 0.1

    params = prepare_params(emb_table, conv_w, conv_b, out_w)   # once, at init
    logits = conv_classifier_forward(inputs, params)
    logits = jax.block_until_ready(logits)

    ref = reference_forward(inputs, emb_table, conv_w, conv_b, out_w, filter_size)
    assert logits.shape == (batch, 2)
    assert jnp.allclose(logits, ref, atol=1e-4, rtol=1e-4), (logits, ref)

    print("KERNEL_OK")
</pallas_src>

<mosaic_0001>
module attributes {stable_mosaic.version = 11 : i64} {
  func.func @charcnn_kernel(%arg0: memref<72x1xi32, #tpu.memory_space<vmem>>, %arg1: memref<20x16xf32, #tpu.memory_space<vmem>>, %arg2: memref<3x16x32xf32, #tpu.memory_space<vmem>>, %arg3: memref<1x32xf32, #tpu.memory_space<vmem>>, %arg4: memref<32x128xf32, #tpu.memory_space<vmem>>, %arg5: memref<8x128xf32, #tpu.memory_space<vmem>>) attributes {dimension_semantics = [], scalar_prefetch = 0 : i64, scratch_operands = 0 : i64, tpu.core_type = #tpu.core_type<tc>} {
    %c0 = arith.constant 0 : index
    %c0_0 = arith.constant 0 : index
    %0 = vector.load %arg0[%c0, %c0_0] : memref<72x1xi32, #tpu.memory_space<vmem>>, vector<72x1xi32>
    %1 = tpu.iota {dimensions = array<i32: 1>} : vector<72x20xi32>
    %2 = vector.broadcast %0 : vector<72x1xi32> to vector<72x20xi32>
    %3 = arith.cmpi eq, %1, %2 : vector<72x20xi32>
    %4 = arith.extui %3 : vector<72x20xi1> to vector<72x20xi32>
    %5 = arith.sitofp %4 : vector<72x20xi32> to vector<72x20xf32>
    %c0_1 = arith.constant 0 : index
    %c0_2 = arith.constant 0 : index
    %6 = vector.load %arg1[%c0_1, %c0_2] : memref<20x16xf32, #tpu.memory_space<vmem>>, vector<20x16xf32>
    %cst = arith.constant dense<0.000000e+00> : vector<72x16xf32>
    %7 = tpu.matmul %5, %6, %cst {dimension_numbers = #tpu.dot_dimension_numbers<[1], [0], [0], [1], [0, 0, 1, 1], [], []>} : vector<72x20xf32>, vector<20x16xf32>, vector<72x16xf32> -> vector<72x16xf32>
    %8 = vector.extract_strided_slice %7 {offsets = [0, 0], sizes = [64, 16], strides = [1, 1]} : vector<72x16xf32> to vector<64x16xf32>
    %c0_3 = arith.constant 0 : index
    %c0_4 = arith.constant 0 : index
    %c0_5 = arith.constant 0 : index
    %9 = vector.load %arg2[%c0_3, %c0_4, %c0_5] : memref<3x16x32xf32, #tpu.memory_space<vmem>>, vector<1x16x32xf32>
    %10 = vector.shape_cast %9 : vector<1x16x32xf32> to vector<16x32xf32>
    %cst_6 = arith.constant dense<0.000000e+00> : vector<64x32xf32>
    %11 = tpu.matmul %8, %10, %cst_6 {dimension_numbers = #tpu.dot_dimension_numbers<[1], [0], [0], [1], [0, 0, 1, 1], [], []>} : vector<64x16xf32>, vector<16x32xf32>, vector<64x32xf32> -> vector<64x32xf32>
    %12 = vector.extract_strided_slice %7 {offsets = [1, 0], sizes = [64, 16], strides = [1, 1]} : vector<72x16xf32> to vector<64x16xf32>
    %c1 = arith.constant 1 : index
    %c0_7 = arith.constant 0 : index
    %c0_8 = arith.constant 0 : index
    %13 = vector.load %arg2[%c1, %c0_7, %c0_8] : memref<3x16x32xf32, #tpu.memory_space<vmem>>, vector<1x16x32xf32>
    %14 = vector.shape_cast %13 : vector<1x16x32xf32> to vector<16x32xf32>
    %cst_9 = arith.constant dense<0.000000e+00> : vector<64x32xf32>
    %15 = tpu.matmul %12, %14, %cst_9 {dimension_numbers = #tpu.dot_dimension_numbers<[1], [0], [0], [1], [0, 0, 1, 1], [], []>} : vector<64x16xf32>, vector<16x32xf32>, vector<64x32xf32> -> vector<64x32xf32>
    %16 = arith.addf %11, %15 : vector<64x32xf32>
    %17 = vector.extract_strided_slice %7 {offsets = [2, 0], sizes = [64, 16], strides = [1, 1]} : vector<72x16xf32> to vector<64x16xf32>
    %c2 = arith.constant 2 : index
    %c0_10 = arith.constant 0 : index
    %c0_11 = arith.constant 0 : index
    %18 = vector.load %arg2[%c2, %c0_10, %c0_11] : memref<3x16x32xf32, #tpu.memory_space<vmem>>, vector<1x16x32xf32>
    %19 = vector.shape_cast %18 : vector<1x16x32xf32> to vector<16x32xf32>
    %cst_12 = arith.constant dense<0.000000e+00> : vector<64x32xf32>
    %20 = tpu.matmul %17, %19, %cst_12 {dimension_numbers = #tpu.dot_dimension_numbers<[1], [0], [0], [1], [0, 0, 1, 1], [], []>} : vector<64x16xf32>, vector<16x32xf32>, vector<64x32xf32> -> vector<64x32xf32>
    %21 = arith.addf %16, %20 : vector<64x32xf32>
    %c0_13 = arith.constant 0 : index
    %c0_14 = arith.constant 0 : index
    %22 = vector.load %arg3[%c0_13, %c0_14] : memref<1x32xf32, #tpu.memory_space<vmem>>, vector<1x32xf32>
    %23 = vector.broadcast %22 : vector<1x32xf32> to vector<64x32xf32>
    %24 = arith.addf %21, %23 : vector<64x32xf32>
    %cst_15 = arith.constant 0.000000e+00 : f32
    %25 = vector.broadcast %cst_15 : f32 to vector<64x32xf32>
    %26 = arith.maximumf %24, %25 : vector<64x32xf32>
    %27 = vector.shape_cast %26 : vector<64x32xf32> to vector<8x8x32xf32>
    %28 = tpu.iota {dimensions = array<i32: 1>} : vector<8x8x32xi32>
    %c6_i32 = arith.constant 6 : i32
    %29 = vector.broadcast %c6_i32 : i32 to vector<8x8x32xi32>
    %30 = arith.cmpi slt, %28, %29 : vector<8x8x32xi32>
    %cst_16 = arith.constant 0.000000e+00 : f32
    %31 = vector.broadcast %cst_16 : f32 to vector<8x8x32xf32>
    %32 = arith.select %30, %27, %31 : vector<8x8x32xi1>, vector<8x8x32xf32>
    %cst_17 = arith.constant dense<0xFF800000> : vector<8x32xf32>
    %33 = vector.multi_reduction <maximumf>, %32, %cst_17 [1] : vector<8x8x32xf32> to vector<8x32xf32>
    %c0_18 = arith.constant 0 : index
    %c0_19 = arith.constant 0 : index
    %34 = vector.load %arg4[%c0_18, %c0_19] : memref<32x128xf32, #tpu.memory_space<vmem>>, vector<32x128xf32>
    %cst_20 = arith.constant dense<0.000000e+00> : vector<8x128xf32>
    %35 = tpu.matmul %33, %34, %cst_20 {dimension_numbers = #tpu.dot_dimension_numbers<[1], [0], [0], [1], [0, 0, 1, 1], [], []>} : vector<8x32xf32>, vector<32x128xf32>, vector<8x128xf32> -> vector<8x128xf32>
    %c0_21 = arith.constant 0 : index
    %c0_22 = arith.constant 0 : index
    %36 = vector.load %arg5[%c0_21, %c0_22] : memref<8x128xf32, #tpu.memory_space<vmem>>, vector<8x128xf32>
    tpu.vector_store %arg5[%c0_21, %c0_22], %35 {strides = array<i32>} : memref<8x128xf32, #tpu.memory_space<vmem>>, vector<8x128xf32>,
    return
  }
}

</mosaic_0001>

<llo_original>
// kernel: tpu_custom_call.1
$region0: #{tpu_custom_call.1}
  #allocation0 [shape = 'u32[]', space=smem, size = 0x4, offset = 0x4, fixed_abs, tag = 'smem constant byte address 0x4 - core index']
  #allocation1 [shape = 'u32[144,128]{1,0:T(1,128)}', space=vmem, size = 0x12000, scoped, tag = 'internal scratch']
  %s0 = inlined_call_operand.vmem [shape: s32[72,1], index: 0, kind: input, shape index: {}]
  %s1 = inlined_call_operand.vmem [shape: f32[20,16], index: 1, kind: input, shape index: {}]
  %s2 = inlined_call_operand.vmem [shape: f32[3,16,32], index: 2, kind: input, shape index: {}]
  %s3 = inlined_call_operand.vmem [shape: f32[1,32], index: 3, kind: input, shape index: {}]
  %s4 = inlined_call_operand.vmem [shape: f32[32,128], index: 4, kind: input, shape index: {}]
  %s5 = inlined_call_operand.hbm [shape: f32[8,128], index: 5, kind: output, shape index: {}]
  %s6 = sld [smem:[#allocation0]]
  $region30: #{tpu_custom_call.1} parent=0
    _
  %s8 = ssub.s32 1, %s6
  %s9 = scalar_select 0, %s8, %s6
  $region1: #{tpu_custom_call.1} parent=0
    #allocation2 [shape = 'u8[4096]{0}', space=vmem, size = 0x1000, scoped, tag = 'output window, operand 0, single buffered']
    #allocation3 [shape = 's32[1]{0}', space=sflag, size = 0x4, scoped, tag = 'scoped memory for tpu_custom_call.1']
    %10 = vsyncpa [#allocation3], 0
    // Predicated region
    $region2: #{tpu_custom_call.1} parent=1 // pred_check
      _
    $region3: #{tpu_custom_call.1} parent=1 // pred_check_branch
      %12 = sbr.rel (0) target = $region5
    $region4: #{tpu_custom_call.1} parent=1 // pred_region
      _
    $region5: #{tpu_custom_call.1} parent=1 // pred_fallthru
      _
    // Predicated region
    $region6: #{tpu_custom_call.1} parent=1 // pred_check
      _
    $region7: #{tpu_custom_call.1} parent=1 // pred_check_branch
      %14 = sbr.rel (0) target = $region9
    $region8: #{tpu_custom_call.1} parent=1 // pred_region
      _
    $region9: #{tpu_custom_call.1} parent=1 // pred_fallthru
      _
    // Predicated region
    $region10: #{tpu_custom_call.1} parent=1 // pred_check
      _
    $region11: #{tpu_custom_call.1} parent=1 // pred_check_branch
      %16 = sbr.rel (0) target = $region13
    $region12: #{tpu_custom_call.1} parent=1 // pred_region
      _
    $region13: #{tpu_custom_call.1} parent=1 // pred_fallthru
      _
    // Predicated region
    $region14: #{tpu_custom_call.1} parent=1 // pred_check
      _
    $region15: #{tpu_custom_call.1} parent=1 // pred_check_branch
      %18 = sbr.rel (0) target = $region17
    $region16: #{tpu_custom_call.1} parent=1 // pred_region
      _
    $region17: #{tpu_custom_call.1} parent=1 // pred_fallthru
      _
    // Predicated region
    $region18: #{tpu_custom_call.1} parent=1 // pred_check
      _
    $region19: #{tpu_custom_call.1} parent=1 // pred_check_branch
      %20 = sbr.rel (0) target = $region21
    $region20: #{tpu_custom_call.1} parent=1 // pred_region
      _
    $region21: #{tpu_custom_call.1} parent=1 // pred_fallthru
      _
    %v21 = vld [vmem:[%s0] sm:$0xff]
    %v22 = vld [vmem:[%s0 + $0x8] sm:$0xff]
    %v23 = vld [vmem:[%s0 + $0x10] sm:$0xff]
    %v24 = vld [vmem:[%s0 + $0x18] sm:$0xff]
    %v25 = vld [vmem:[%s0 + $0x20] sm:$0xff]
    %v26 = vld [vmem:[%s0 + $0x28] sm:$0xff]
    %v27 = vld [vmem:[%s0 + $0x30] sm:$0xff]
    %v28 = vld [vmem:[%s0 + $0x38] sm:$0xff]
    %v29 = vld [vmem:[%s0 + $0x40] sm:$0xff]
    %v30 = vlaneseq
    %v31 = vand.u32 %v30, 127
    %32 = vset.pattern.permute.xlu0 0
    %33 = vperm.xlu0 %32, %v21
    %v34 = vpop.permute.xlu0 %33
    %35 = vset.pattern.permute.xlu0 0
    %36 = vperm.xlu0 %35, %v22
    %v37 = vpop.permute.xlu0 %36
    %38 = vset.pattern.permute.xlu0 0
    %39 = vperm.xlu0 %38, %v23
    %v40 = vpop.permute.xlu0 %39
    %41 = vset.pattern.permute.xlu0 0
    %42 = vperm.xlu0 %41, %v24
    %v43 = vpop.permute.xlu0 %42
    %44 = vset.pattern.permute.xlu0 0
    %45 = vperm.xlu0 %44, %v25
    %v46 = vpop.permute.xlu0 %45
    %47 = vset.pattern.permute.xlu0 0
    %48 = vperm.xlu0 %47, %v26
    %v49 = vpop.permute.xlu0 %48
    %50 = vset.pattern.permute.xlu0 0
    %51 = vperm.xlu0 %50, %v27
    %v52 = vpop.permute.xlu0 %51
    %53 = vset.pattern.permute.xlu0 0
    %54 = vperm.xlu0 %53, %v28
    %v55 = vpop.permute.xlu0 %54
    %56 = vset.pattern.permute.xlu0 0
    %57 = vperm.xlu0 %56, %v29
    %v58 = vpop.permute.xlu0 %57
    %vm59 = vcmp.eq.s32.totalorder %v31, %v34
    %vm60 = vcmp.eq.s32.totalorder %v31, %v37
    %vm61 = vcmp.eq.s32.totalorder %v31, %v40
    %vm62 = vcmp.eq.s32.totalorder %v31, %v43
    %vm63 = vcmp.eq.s32.totalorder %v31, %v46
    %vm64 = vcmp.eq.s32.totalorder %v31, %v49
    %vm65 = vcmp.eq.s32.totalorder %v31, %v52
    %vm66 = vcmp.eq.s32.totalorder %v31, %v55
    %vm67 = vcmp.eq.s32.totalorder %v31, %v58
    %v68 = vsel %vm59, 1, 0
    %v69 = vsel %vm60, 1, 0
    %v70 = vsel %vm61, 1, 0
    %v71 = vsel %vm62, 1, 0
    %v72 = vsel %vm63, 1, 0
    %v73 = vsel %vm64, 1, 0
    %v74 = vsel %vm65, 1, 0
    %v75 = vsel %vm66, 1, 0
    %v76 = vsel %vm67, 1, 0
    %v77 = vcvt.s32.f32 %v68
    %v78 = vcvt.s32.f32 %v69
    %v79 = vcvt.s32.f32 %v70
    %v80 = vcvt.s32.f32 %v71
    %v81 = vcvt.s32.f32 %v72
    %v82 = vcvt.s32.f32 %v73
    %v83 = vcvt.s32.f32 %v74
    %v84 = vcvt.s32.f32 %v75
    %v85 = vcvt.s32.f32 %v76
    %v86 = vld [vmem:[%s1] sm:$0xff]
    %v87 = vld [vmem:[%s1 + $0x8] sm:$0xff]
    %v88 = vld [vmem:[%s1 + $0x10] sm:$0xf]
    %vm89 = vcmask 162816
    %v91 = vsel %vm89, %v77, 0
    %v94 = vsel %vm89, %v78, 0
    %v97 = vsel %vm89, %v79, 0
    %v100 = vsel %vm89, %v80, 0
    %v103 = vsel %vm89, %v81, 0
    %v106 = vsel %vm89, %v82, 0
    %v109 = vsel %vm89, %v83, 0
    %v112 = vsel %vm89, %v84, 0
    %v115 = vsel %vm89, %v85, 0
    %vm117 = vcmask 1043456
    %v119 = vsel %vm117, %v88, 0
    %121 = vmatprep.subr.mxu0 0.0
    %122 = vmatpush1.msra.mxu0 0.0
    %123 = vmatprep.subr.mxu0 0.0
    %124 = vmatpush1.msra.mxu0 0.0
    %125 = vmatprep.subr.mxu0 0.0
    %126 = vmatpush1.msra.mxu0 0.0
    %127 = vmatprep.subr.mxu0 0.0
    %128 = vmatpush1.msra.mxu0 0.0
    %129 = vmatprep.subr.mxu0 0.0
    %130 = vmatpush1.msra.mxu0 0.0
    %131 = vmatprep.subr.mxu0 0.0
    %132 = vmatpush1.msra.mxu0 0.0
    %133 = vmatprep.subr.mxu0 0.0
    %134 = vmatpush1.msra.mxu0 0.0
    %135 = vmatprep.subr.mxu0 0.0
    %136 = vmatpush1.msra.mxu0 0.0
    %137 = vmatprep.subr.mxu0 0.0
    %138 = vmatpush1.msra.mxu0 0.0
    %139 = vmatprep.subr.mxu0 0.0
    %140 = vmatpush1.msra.mxu0 0.0
    %141 = vmatprep.subr.mxu0 0.0
    %142 = vmatpush1.msra.mxu0 0.0
    %143 = vmatprep.subr.mxu0 0.0
    %144 = vmatpush1.msra.mxu0 0.0
    %145 = vmatprep.subr.mxu0 0.0
    %146 = vmatpush1.msra.mxu0 0.0
    %147 = vmatprep.subr.mxu0 0.0
    %148 = vmatpush1.msra.mxu0 %v119
    %149 = vmatprep.subr.mxu0 0.0
    %150 = vmatpush1.msra.mxu0 %v87
    %151 = vmatprep.subr.mxu0 0.0
    %152 = vmatpush1.msra.mxu0 %v86
    %153 = vmatprep.subr.mxu0 0.0
    %154 = vmatpush2.msra.mxu0 0.0
    %155 = vmatprep.subr.mxu0 0.0
    %156 = vmatpush2.msra.mxu0 0.0
    %157 = vmatprep.subr.mxu0 0.0
    %158 = vmatpush2.msra.mxu0 0.0
    %159 = vmatprep.subr.mxu0 0.0
    %160 = vmatpush2.msra.mxu0 0.0
    %161 = vmatprep.subr.mxu0 0.0
    %162 = vmatpush2.msra.mxu0 0.0
    %163 = vmatprep.subr.mxu0 0.0
    %164 = vmatpush2.msra.mxu0 0.0
    %165 = vmatprep.subr.mxu0 0.0
    %166 = vmatpush2.msra.mxu0 0.0
    %167 = vmatprep.subr.mxu0 0.0
    %168 = vmatpush2.msra.mxu0 0.0
    %169 = vmatprep.subr.mxu0 0.0
    %170 = vmatpush2.msra.mxu0 0.0
    %171 = vmatprep.subr.mxu0 0.0
    %172 = vmatpush2.msra.mxu0 0.0
    %173 = vmatprep.subr.mxu0 0.0
    %174 = vmatpush2.msra.mxu0 0.0
    %175 = vmatprep.subr.mxu0 0.0
    %176 = vmatpush2.msra.mxu0 0.0
    %177 = vmatprep.subr.mxu0 0.0
    %178 = vmatpush2.msra.mxu0 0.0
    %179 = vmatprep.subr.mxu0 0.0
    %180 = vmatpush2.msra.mxu0 0.0
    %181 = vmatprep.subr.mxu0 0.0
    %182 = vmatpush2.msra.mxu0 0.0
    %183 = vmatprep.subr.mxu0 0.0
    %184 = vmatpush2.msra.mxu0 0.0
    %185 = vmatprep.mubr.f32.mxu0 0.0
    %186 = vmatmul.mubr.f32.gmra.mxu0 %v91
    %v187 = vpop.f32.mrf.mxu0
    %v188 = vadd.f32 0.0, %v187
    %v189 = vpop.f32.mrf.mxu0
    %190 = vmatprep.mubr.f32.mxu0 0.0
    %191 = vmatmul.mubr.f32.gmra.mxu0 %v94
    %v192 = vpop.f32.mrf.mxu0
    %v193 = vadd.f32 0.0, %v192
    %v194 = vpop.f32.mrf.mxu0
    %195 = vmatprep.mubr.f32.mxu0 0.0
    %196 = vmatmul.mubr.f32.gmra.mxu0 %v97
    %v197 = vpop.f32.mrf.mxu0
    %v198 = vadd.f32 0.0, %v197
    %v199 = vpop.f32.mrf.mxu0
    %200 = vmatprep.mubr.f32.mxu0 0.0
    %201 = vmatmul.mubr.f32.gmra.mxu0 %v100
    %v202 = vpop.f32.mrf.mxu0
    %v203 = vadd.f32 0.0, %v202
    %v204 = vpop.f32.mrf.mxu0
    %205 = vmatprep.mubr.f32.mxu0 0.0
    %206 = vmatmul.mubr.f32.gmra.mxu0 %v103
    %v207 = vpop.f32.mrf.mxu0
    %v208 = vadd.f32 0.0, %v207
    %v209 = vpop.f32.mrf.mxu0
    %210 = vmatprep.mubr.f32.mxu0 0.0
    %211 = vmatmul.mubr.f32.gmra.mxu0 %v106
    %v212 = vpop.f32.mrf.mxu0
    %v213 = vadd.f32 0.0, %v212
    %v214 = vpop.f32.mrf.mxu0
    %215 = vmatprep.mubr.f32.mxu0 0.0
    %216 = vmatmul.mubr.f32.gmra.mxu0 %v109
    %v217 = vpop.f32.mrf.mxu0
    %v218 = vadd.f32 0.0, %v217
    %v219 = vpop.f32.mrf.mxu0
    %220 = vmatprep.mubr.f32.mxu0 0.0
    %221 = vmatmul.mubr.f32.gmra.mxu0 %v112
    %v222 = vpop.f32.mrf.mxu0
    %v223 = vadd.f32 0.0, %v222
    %v224 = vpop.f32.mrf.mxu0
    %225 = vmatprep.mubr.f32.mxu0 0.0
    %226 = vmatmul.mubr.f32.gmra.mxu0 %v115
    %v227 = vpop.f32.mrf.mxu0
    %v228 = vadd.f32 0.0, %v227
    %v229 = vpop.f32.mrf.mxu0
    %230 = vdwg.mxu0
    %v231 = vld [vmem:[%s2] sm:$0xff]
    %v232 = vld [vmem:[%s2 + $0x8] sm:$0xff]
    %s233 = scalar_lea.vmem %s2, 16
    %v234 = vld [vmem:[%s233] sm:$0xff]
    %v235 = vld [vmem:[%s233 + $0x8] sm:$0xff]
    %vm245 = vcmask 1046528
    %v246 = vrot.slane %v188, 1
    %v247 = vrot.slane %v193, 1
    %v248 = vsel %vm245, %v246, %v247
    %v249 = vrot.slane %v198, 1
    %v250 = vsel %vm245, %v247, %v249
    %v251 = vrot.slane %v203, 1
    %v252 = vsel %vm245, %v249, %v251
    %v253 = vrot.slane %v208, 1
    %v254 = vsel %vm245, %v251, %v253
    %v255 = vrot.slane %v213, 1
    %v256 = vsel %vm245, %v253, %v255
    %v257 = vrot.slane %v218, 1
    %v258 = vsel %vm245, %v255, %v257
    %v259 = vrot.slane %v223, 1
    %v260 = vsel %vm245, %v257, %v259
    %v261 = vrot.slane %v228, 1
    %v262 = vsel %vm245, %v259, %v261
    %vm263 = vcmask 130048
    %v264 = vsel %vm263, %v248, 0
    %v266 = vsel %vm263, %v250, 0
    %v268 = vsel %vm263, %v252, 0
    %v270 = vsel %vm263, %v254, 0
    %v272 = vsel %vm263, %v256, 0
    %v274 = vsel %vm263, %v258, 0
    %v276 = vsel %vm263, %v260, 0
    %v278 = vsel %vm263, %v262, 0
    %280 = vmatprep.subr.mxu0 0.0
    %281 = vmatpush1.msra.mxu0 0.0
    %282 = vmatprep.subr.mxu0 0.0
    %283 = vmatpush1.msra.mxu0 0.0
    %284 = vmatprep.subr.mxu0 0.0
    %285 = vmatpush1.msra.mxu0 0.0
    %286 = vmatprep.subr.mxu0 0.0
    %287 = vmatpush1.msra.mxu0 0.0
    %288 = vmatprep.subr.mxu0 0.0
    %289 = vmatpush1.msra.mxu0 0.0
    %290 = vmatprep.subr.mxu0 0.0
    %291 = vmatpush1.msra.mxu0 0.0
    %292 = vmatprep.subr.mxu0 0.0
    %293 = vmatpush1.msra.mxu0 0.0
    %294 = vmatprep.subr.mxu0 0.0
    %295 = vmatpush1.msra.mxu0 0.0
    %296 = vmatprep.subr.mxu0 0.0
    %297 = vmatpush1.msra.mxu0 0.0
    %298 = vmatprep.subr.mxu0 0.0
    %299 = vmatpush1.msra.mxu0 0.0
    %300 = vmatprep.subr.mxu0 0.0
    %301 = vmatpush1.msra.mxu0 0.0
    %302 = vmatprep.subr.mxu0 0.0
    %303 = vmatpush1.msra.mxu0 0.0
    %304 = vmatprep.subr.mxu0 0.0
    %305 = vmatpush1.msra.mxu0 0.0
    %306 = vmatprep.subr.mxu0 0.0
    %307 = vmatpush1.msra.mxu0 0.0
    %308 = vmatprep.subr.mxu0 0.0
    %309 = vmatpush1.msra.mxu0 %v235
    %310 = vmatprep.subr.mxu0 0.0
    %311 = vmatpush1.msra.mxu0 %v234
    %312 = vmatprep.subr.mxu0 0.0
    %313 = vmatpush2.msra.mxu0 0.0
    %314 = vmatprep.subr.mxu0 0.0
    %315 = vmatpush2.msra.mxu0 0.0
    %316 = vmatprep.subr.mxu0 0.0
    %317 = vmatpush2.msra.mxu0 0.0
    %318 = vmatprep.subr.mxu0 0.0
    %319 = vmatpush2.msra.mxu0 0.0
    %320 = vmatprep.subr.mxu0 0.0
    %321 = vmatpush2.msra.mxu0 0.0
    %322 = vmatprep.subr.mxu0 0.0
    %323 = vmatpush2.msra.mxu0 0.0
    %324 = vmatprep.subr.mxu0 0.0
    %325 = vmatpush2.msra.mxu0 0.0
    %326 = vmatprep.subr.mxu0 0.0
    %327 = vmatpush2.msra.mxu0 0.0
    %328 = vmatprep.subr.mxu0 0.0
    %329 = vmatpush2.msra.mxu0 0.0
    %330 = vmatprep.subr.mxu0 0.0
    %331 = vmatpush2.msra.mxu0 0.0
    %332 = vmatprep.subr.mxu0 0.0
    %333 = vmatpush2.msra.mxu0 0.0
    %334 = vmatprep.subr.mxu0 0.0
    %335 = vmatpush2.msra.mxu0 0.0
    %336 = vmatprep.subr.mxu0 0.0
    %337 = vmatpush2.msra.mxu0 0.0
    %338 = vmatprep.subr.mxu0 0.0
    %339 = vmatpush2.msra.mxu0 0.0
    %340 = vmatprep.subr.mxu0 0.0
    %341 = vmatpush2.msra.mxu0 0.0
    %342 = vmatprep.subr.mxu0 0.0
    %343 = vmatpush2.msra.mxu0 0.0
    %344 = vmatprep.mubr.f32.mxu0 0.0
    %345 = vmatmul.mubr.f32.gmra.mxu0 %v264
    %v346 = vpop.f32.mrf.mxu0
    %v347 = vadd.f32 0.0, %v346
    %v348 = vpop.f32.mrf.mxu0
    %349 = vmatprep.mubr.f32.mxu0 0.0
    %350 = vmatmul.mubr.f32.gmra.mxu0 %v266
    %v351 = vpop.f32.mrf.mxu0
    %v352 = vadd.f32 0.0, %v351
    %v353 = vpop.f32.mrf.mxu0
    %354 = vmatprep.mubr.f32.mxu0 0.0
    %355 = vmatmul.mubr.f32.gmra.mxu0 %v268
    %v356 = vpop.f32.mrf.mxu0
    %v357 = vadd.f32 0.0, %v356
    %v358 = vpop.f32.mrf.mxu0
    %359 = vmatprep.mubr.f32.mxu0 0.0
    %360 = vmatmul.mubr.f32.gmra.mxu0 %v270
    %v361 = vpop.f32.mrf.mxu0
    %v362 = vadd.f32 0.0, %v361
    %v363 = vpop.f32.mrf.mxu0
    %364 = vmatprep.mubr.f32.mxu0 0.0
    %365 = vmatmul.mubr.f32.gmra.mxu0 %v272
    %v366 = vpop.f32.mrf.mxu0
    %v367 = vadd.f32 0.0, %v366
    %v368 = vpop.f32.mrf.mxu0
    %369 = vmatprep.mubr.f32.mxu0 0.0
    %370 = vmatmul.mubr.f32.gmra.mxu0 %v274
    %v371 = vpop.f32.mrf.mxu0
    %v372 = vadd.f32 0.0, %v371
    %v373 = vpop.f32.mrf.mxu0
    %374 = vmatprep.mubr.f32.mxu0 0.0
    %375 = vmatmul.mubr.f32.gmra.mxu0 %v276
    %v376 = vpop.f32.mrf.mxu0
    %v377 = vadd.f32 0.0, %v376
    %v378 = vpop.f32.mrf.mxu0
    %379 = vmatprep.mubr.f32.mxu0 0.0
    %380 = vmatmul.mubr.f32.gmra.mxu0 %v278
    %v381 = vpop.f32.mrf.mxu0
    %v382 = vadd.f32 0.0, %v381
    %v383 = vpop.f32.mrf.mxu0
    %384 = vdwg.mxu0
    %v385 = vsel %vm263, %v188, 0
    %v387 = vsel %vm263, %v193, 0
    %v389 = vsel %vm263, %v198, 0
    %v391 = vsel %vm263, %v203, 0
    %v393 = vsel %vm263, %v208, 0
    %v395 = vsel %vm263, %v213, 0
    %v397 = vsel %vm263, %v218, 0
    %v399 = vsel %vm263, %v223, 0
    %401 = vmatprep.subr.mxu0 0.0
    %402 = vmatpush1.msra.mxu0 0.0
    %403 = vmatprep.subr.mxu0 0.0
    %404 = vmatpush1.msra.mxu0 0.0
    %405 = vmatprep.subr.mxu0 0.0
    %406 = vmatpush1.msra.mxu0 0.0
    %407 = vmatprep.subr.mxu0 0.0
    %408 = vmatpush1.msra.mxu0 0.0
    %409 = vmatprep.subr.mxu0 0.0
    %410 = vmatpush1.msra.mxu0 0.0
    %411 = vmatprep.subr.mxu0 0.0
    %412 = vmatpush1.msra.mxu0 0.0
    %413 = vmatprep.subr.mxu0 0.0
    %414 = vmatpush1.msra.mxu0 0.0
    %415 = vmatprep.subr.mxu0 0.0
    %416 = vmatpush1.msra.mxu0 0.0
    %417 = vmatprep.subr.mxu0 0.0
    %418 = vmatpush1.msra.mxu0 0.0
    %419 = vmatprep.subr.mxu0 0.0
    %420 = vmatpush1.msra.mxu0 0.0
    %421 = vmatprep.subr.mxu0 0.0
    %422 = vmatpush1.msra.mxu0 0.0
    %423 = vmatprep.subr.mxu0 0.0
    %424 = vmatpush1.msra.mxu0 0.0
    %425 = vmatprep.subr.mxu0 0.0
    %426 = vmatpush1.msra.mxu0 0.0
    %427 = vmatprep.subr.mxu0 0.0
    %428 = vmatpush1.msra.mxu0 0.0
    %429 = vmatprep.subr.mxu0 0.0
    %430 = vmatpush1.msra.mxu0 %v232
    %431 = vmatprep.subr.mxu0 0.0
    %432 = vmatpush1.msra.mxu0 %v231
    %433 = vmatprep.subr.mxu0 0.0
    %434 = vmatpush2.msra.mxu0 0.0
    %435 = vmatprep.subr.mxu0 0.0
    %436 = vmatpush2.msra.mxu0 0.0
    %437 = vmatprep.subr.mxu0 0.0
    %438 = vmatpush2.msra.mxu0 0.0
    %439 = vmatprep.subr.mxu0 0.0
    %440 = vmatpush2.msra.mxu0 0.0
    %441 = vmatprep.subr.mxu0 0.0
    %442 = vmatpush2.msra.mxu0 0.0
    %443 = vmatprep.subr.mxu0 0.0
    %444 = vmatpush2.msra.mxu0 0.0
    %445 = vmatprep.subr.mxu0 0.0
    %446 = vmatpush2.msra.mxu0 0.0
    %447 = vmatprep.subr.mxu0 0.0
    %448 = vmatpush2.msra.mxu0 0.0
    %449 = vmatprep.subr.mxu0 0.0
    %450 = vmatpush2.msra.mxu0 0.0
    %451 = vmatprep.subr.mxu0 0.0
    %452 = vmatpush2.msra.mxu0 0.0
    %453 = vmatprep.subr.mxu0 0.0
    %454 = vmatpush2.msra.mxu0 0.0
    %455 = vmatprep.subr.mxu0 0.0
    %456 = vmatpush2.msra.mxu0 0.0
    %457 = vmatprep.subr.mxu0 0.0
    %458 = vmatpush2.msra.mxu0 0.0
    %459 = vmatprep.subr.mxu0 0.0
    %460 = vmatpush2.msra.mxu0 0.0
    %461 = vmatprep.subr.mxu0 0.0
    %462 = vmatpush2.msra.mxu0 0.0
    %463 = vmatprep.subr.mxu0 0.0
    %464 = vmatpush2.msra.mxu0 0.0
    %465 = vmatprep.mubr.f32.mxu0 0.0
    %466 = vmatmul.mubr.f32.gmra.mxu0 %v385
    %v467 = vpop.f32.mrf.mxu0
    %v468 = vadd.f32 %v347, %v467
    %v469 = vpop.f32.mrf.mxu0
    %470 = vmatprep.mubr.f32.mxu0 0.0
    %471 = vmatmul.mubr.f32.gmra.mxu0 %v387
    %v472 = vpop.f32.mrf.mxu0
    %v473 = vadd.f32 %v352, %v472
    %v474 = vpop.f32.mrf.mxu0
    %475 = vmatprep.mubr.f32.mxu0 0.0
    %476 = vmatmul.mubr.f32.gmra.mxu0 %v389
    %v477 = vpop.f32.mrf.mxu0
    %v478 = vadd.f32 %v357, %v477
    %v479 = vpop.f32.mrf.mxu0
    %480 = vmatprep.mubr.f32.mxu0 0.0
    %481 = vmatmul.mubr.f32.gmra.mxu0 %v391
    %v482 = vpop.f32.mrf.mxu0
    %v483 = vadd.f32 %v362, %v482
    %v484 = vpop.f32.mrf.mxu0
    %485 = vmatprep.mubr.f32.mxu0 0.0
    %486 = vmatmul.mubr.f32.gmra.mxu0 %v393
    %v487 = vpop.f32.mrf.mxu0
    %v488 = vadd.f32 %v367, %v487
    %v489 = vpop.f32.mrf.mxu0
    %490 = vmatprep.mubr.f32.mxu0 0.0
    %491 = vmatmul.mubr.f32.gmra.mxu0 %v395
    %v492 = vpop.f32.mrf.mxu0
    %v493 = vadd.f32 %v372, %v492
    %v494 = vpop.f32.mrf.mxu0
    %495 = vmatprep.mubr.f32.mxu0 0.0
    %496 = vmatmul.mubr.f32.gmra.mxu0 %v397
    %v497 = vpop.f32.mrf.mxu0
    %v498 = vadd.f32 %v377, %v497
    %v499 = vpop.f32.mrf.mxu0
    %500 = vmatprep.mubr.f32.mxu0 0.0
    %501 = vmatmul.mubr.f32.gmra.mxu0 %v399
    %v502 = vpop.f32.mrf.mxu0
    %v503 = vadd.f32 %v382, %v502
    %v504 = vpop.f32.mrf.mxu0
    %505 = vdwg.mxu0
    %s506 = scalar_lea.vmem %s2, 32
    %v507 = vld [vmem:[%s506] sm:$0xff]
    %v508 = vld [vmem:[%s506 + $0x8] sm:$0xff]
    %vm509 = vcmask 1045504
    %v510 = vrot.slane %v188, 2
    %v511 = vrot.slane %v193, 2
    %v512 = vsel %vm509, %v510, %v511
    %v513 = vrot.slane %v198, 2
    %v514 = vsel %vm509, %v511, %v513
    %v515 = vrot.slane %v203, 2
    %v516 = vsel %vm509, %v513, %v515
    %v517 = vrot.slane %v208, 2
    %v518 = vsel %vm509, %v515, %v517
    %v519 = vrot.slane %v213, 2
    %v520 = vsel %vm509, %v517, %v519
    %v521 = vrot.slane %v218, 2
    %v522 = vsel %vm509, %v519, %v521
    %v523 = vrot.slane %v223, 2
    %v524 = vsel %vm509, %v521, %v523
    %v525 = vrot.slane %v228, 2
    %v526 = vsel %vm509, %v523, %v525
    %v527 = vsel %vm263, %v512, 0
    %v529 = vsel %vm263, %v514, 0
    %v531 = vsel %vm263, %v516, 0
    %v533 = vsel %vm263, %v518, 0
    %v535 = vsel %vm263, %v520, 0
    %v537 = vsel %vm263, %v522, 0
    %v539 = vsel %vm263, %v524, 0
    %v541 = vsel %vm263, %v526, 0
    %543 = vmatprep.subr.mxu0 0.0
    %544 = vmatpush1.msra.mxu0 0.0
    %545 = vmatprep.subr.mxu0 0.0
    %546 = vmatpush1.msra.mxu0 0.0
    %547 = vmatprep.subr.mxu0 0.0
    %548 = vmatpush1.msra.mxu0 0.0
    %549 = vmatprep.subr.mxu0 0.0
    %550 = vmatpush1.msra.mxu0 0.0
    %551 = vmatprep.subr.mxu0 0.0
    %552 = vmatpush1.msra.mxu0 0.0
    %553 = vmatprep.subr.mxu0 0.0
    %554 = vmatpush1.msra.mxu0 0.0
    %555 = vmatprep.subr.mxu0 0.0
    %556 = vmatpush1.msra.mxu0 0.0
    %557 = vmatprep.subr.mxu0 0.0
    %558 = vmatpush1.msra.mxu0 0.0
    %559 = vmatprep.subr.mxu0 0.0
    %560 = vmatpush1.msra.mxu0 0.0
    %561 = vmatprep.subr.mxu0 0.0
    %562 = vmatpush1.msra.mxu0 0.0
    %563 = vmatprep.subr.mxu0 0.0
    %564 = vmatpush1.msra.mxu0 0.0
    %565 = vmatprep.subr.mxu0 0.0
    %566 = vmatpush1.msra.mxu0 0.0
    %567 = vmatprep.subr.mxu0 0.0
    %568 = vmatpush1.msra.mxu0 0.0
    %569 = vmatprep.subr.mxu0 0.0
    %570 = vmatpush1.msra.mxu0 0.0
    %571 = vmatprep.subr.mxu0 0.0
    %572 = vmatpush1.msra.mxu0 %v508
    %573 = vmatprep.subr.mxu0 0.0
    %574 = vmatpush1.msra.mxu0 %v507
    %575 = vmatprep.subr.mxu0 0.0
    %576 = vmatpush2.msra.mxu0 0.0
    %577 = vmatprep.subr.mxu0 0.0
    %578 = vmatpush2.msra.mxu0 0.0
    %579 = vmatprep.subr.mxu0 0.0
    %580 = vmatpush2.msra.mxu0 0.0
    %581 = vmatprep.subr.mxu0 0.0
    %582 = vmatpush2.msra.mxu0 0.0
    %583 = vmatprep.subr.mxu0 0.0
    %584 = vmatpush2.msra.mxu0 0.0
    %585 = vmatprep.subr.mxu0 0.0
    %586 = vmatpush2.msra.mxu0 0.0
    %587 = vmatprep.subr.mxu0 0.0
    %588 = vmatpush2.msra.mxu0 0.0
    %589 = vmatprep.subr.mxu0 0.0
    %590 = vmatpush2.msra.mxu0 0.0
    %591 = vmatprep.subr.mxu0 0.0
    %592 = vmatpush2.msra.mxu0 0.0
    %593 = vmatprep.subr.mxu0 0.0
    %594 = vmatpush2.msra.mxu0 0.0
    %595 = vmatprep.subr.mxu0 0.0
    %596 = vmatpush2.msra.mxu0 0.0
    %597 = vmatprep.subr.mxu0 0.0
    %598 = vmatpush2.msra.mxu0 0.0
    %599 = vmatprep.subr.mxu0 0.0
    %600 = vmatpush2.msra.mxu0 0.0
    %601 = vmatprep.subr.mxu0 0.0
    %602 = vmatpush2.msra.mxu0 0.0
    %603 = vmatprep.subr.mxu0 0.0
    %604 = vmatpush2.msra.mxu0 0.0
    %605 = vmatprep.subr.mxu0 0.0
    %606 = vmatpush2.msra.mxu0 0.0
    %607 = vmatprep.mubr.f32.mxu0 0.0
    %608 = vmatmul.mubr.f32.gmra.mxu0 %v527
    %v609 = vpop.f32.mrf.mxu0
    %v610 = vadd.f32 0.0, %v609
    %v611 = vpop.f32.mrf.mxu0
    %612 = vmatprep.mubr.f32.mxu0 0.0
    %613 = vmatmul.mubr.f32.gmra.mxu0 %v529
    %v614 = vpop.f32.mrf.mxu0
    %v615 = vadd.f32 0.0, %v614
    %v616 = vpop.f32.mrf.mxu0
    %617 = vmatprep.mubr.f32.mxu0 0.0
    %618 = vmatmul.mubr.f32.gmra.mxu0 %v531
    %v619 = vpop.f32.mrf.mxu0
    %v620 = vadd.f32 0.0, %v619
    %v621 = vpop.f32.mrf.mxu0
    %622 = vmatprep.mubr.f32.mxu0 0.0
    %623 = vmatmul.mubr.f32.gmra.mxu0 %v533
    %v624 = vpop.f32.mrf.mxu0
    %v625 = vadd.f32 0.0, %v624
    %v626 = vpop.f32.mrf.mxu0
    %627 = vmatprep.mubr.f32.mxu0 0.0
    %628 = vmatmul.mubr.f32.gmra.mxu0 %v535
    %v629 = vpop.f32.mrf.mxu0
    %v630 = vadd.f32 0.0, %v629
    %v631 = vpop.f32.mrf.mxu0
    %632 = vmatprep.mubr.f32.mxu0 0.0
    %633 = vmatmul.mubr.f32.gmra.mxu0 %v537
    %v634 = vpop.f32.mrf.mxu0
    %v635 = vadd.f32 0.0, %v634
    %v636 = vpop.f32.mrf.mxu0
    %637 = vmatprep.mubr.f32.mxu0 0.0
    %638 = vmatmul.mubr.f32.gmra.mxu0 %v539
    %v639 = vpop.f32.mrf.mxu0
    %v640 = vadd.f32 0.0, %v639
    %v641 = vpop.f32.mrf.mxu0
    %642 = vmatprep.mubr.f32.mxu0 0.0
    %643 = vmatmul.mubr.f32.gmra.mxu0 %v541
    %v644 = vpop.f32.mrf.mxu0
    %v645 = vadd.f32 0.0, %v644
    %v646 = vpop.f32.mrf.mxu0
    %647 = vdwg.mxu0
    %v648 = vadd.f32 %v468, %v610
    %v649 = vadd.f32 %v473, %v615
    %v650 = vadd.f32 %v478, %v620
    %v651 = vadd.f32 %v483, %v625
    %v652 = vadd.f32 %v488, %v630
    %v653 = vadd.f32 %v493, %v635
    %v654 = vadd.f32 %v498, %v640
    %v655 = vadd.f32 %v503, %v645
    %v656 = vld [vmem:[%s3] sm:$0x1]
    %v658 = vlaneseq
    %v659 = vshrl.u32 %v658, 7
    %v660 = vsub.s32 0, %v659
    %v661 = vrot.slane %v656, %v660
    %v663 = vadd.f32 %v648, %v661
    %v664 = vadd.f32 %v649, %v661
    %v665 = vadd.f32 %v650, %v661
    %v666 = vadd.f32 %v651, %v661
    %v667 = vadd.f32 %v652, %v661
    %v668 = vadd.f32 %v653, %v661
    %v669 = vadd.f32 %v654, %v661
    %v670 = vadd.f32 %v655, %v661
    %v671 = vmax.f32 %v663, 0.0
    %v672 = vmax.f32 %v664, 0.0
    %v673 = vmax.f32 %v665, 0.0
    %v674 = vmax.f32 %v666, 0.0
    %v675 = vmax.f32 %v667, 0.0
    %v676 = vmax.f32 %v668, 0.0
    %v677 = vmax.f32 %v669, 0.0
    %v678 = vmax.f32 %v670, 0.0
    %v679 = vlaneseq
    %v680 = vshrl.u32 %v679, 7
    %vm681 = vcmp.lt.s32.totalorder %v680, 6
    %v682 = vsel %vm681, %v671, 0.0
    %v683 = vsel %vm681, %v672, 0.0
    %v684 = vsel %vm681, %v673, 0.0
    %v685 = vsel %vm681, %v674, 0.0
    %v686 = vsel %vm681, %v675, 0.0
    %v687 = vsel %vm681, %v676, 0.0
    %v688 = vsel %vm681, %v677, 0.0
    %v689 = vsel %vm681, %v678, 0.0
    %vm690 = vcmask 261120
    %v691 = vsel %vm690, %v682, -inf
    %v692 = vrot.slane %v691, 4
    %v693 = vmax.f32 %v691, %v692
    %v694 = vrot.slane %v693, 2
    %v695 = vmax.f32 %v693, %v694
    %v696 = vrot.slane %v695, 1
    %v697 = vmax.f32 %v695, %v696
    %v698 = vsel %vm690, %v683, -inf
    %v699 = vrot.slane %v698, 4
    %v700 = vmax.f32 %v698, %v699
    %v701 = vrot.slane %v700, 2
    %v702 = vmax.f32 %v700, %v701
    %v703 = vrot.slane %v702, 1
    %v704 = vmax.f32 %v702, %v703
    %v705 = vsel %vm690, %v684, -inf
    %v706 = vrot.slane %v705, 4
    %v707 = vmax.f32 %v705, %v706
    %v708 = vrot.slane %v707, 2
    %v709 = vmax.f32 %v707, %v708
    %v710 = vrot.slane %v709, 1
    %v711 = vmax.f32 %v709, %v710
    %v712 = vsel %vm690, %v685, -inf
    %v713 = vrot.slane %v712, 4
    %v714 = vmax.f32 %v712, %v713
    %v715 = vrot.slane %v714, 2
    %v716 = vmax.f32 %v714, %v715
    %v717 = vrot.slane %v716, 1
    %v718 = vmax.f32 %v716, %v717
    %v719 = vsel %vm690, %v686, -inf
    %v720 = vrot.slane %v719, 4
    %v721 = vmax.f32 %v719, %v720
    %v722 = vrot.slane %v721, 2
    %v723 = vmax.f32 %v721, %v722
    %v724 = vrot.slane %v723, 1
    %v725 = vmax.f32 %v723, %v724
    %v726 = vsel %vm690, %v687, -inf
    %v727 = vrot.slane %v726, 4
    %v728 = vmax.f32 %v726, %v727
    %v729 = vrot.slane %v728, 2
    %v730 = vmax.f32 %v728, %v729
    %v731 = vrot.slane %v730, 1
    %v732 = vmax.f32 %v730, %v731
    %v733 = vsel %vm690, %v688, -inf
    %v734 = vrot.slane %v733, 4
    %v735 = vmax.f32 %v733, %v734
    %v736 = vrot.slane %v735, 2
    %v737 = vmax.f32 %v735, %v736
    %v738 = vrot.slane %v737, 1
    %v739 = vmax.f32 %v737, %v738
    %v740 = vsel %vm690, %v689, -inf
    %v741 = vrot.slane %v740, 4
    %v742 = vmax.f32 %v740, %v741
    %v743 = vrot.slane %v742, 2
    %v744 = vmax.f32 %v742, %v743
    %v745 = vrot.slane %v744, 1
    %v746 = vmax.f32 %v744, %v745
    %v747 = vld [vmem:[%s4] sm:$0xff]
    %v748 = vld [vmem:[%s4 + $0x8] sm:$0xff]
    %v749 = vld [vmem:[%s4 + $0x10] sm:$0xff]
    %v750 = vld [vmem:[%s4 + $0x18] sm:$0xff]
    %vm759 = vcmask 1041409
    %v760 = vsel %vm759, %v704, %v697
    %vm761 = vcmask 1042434
    %v762 = vsel %vm761, %v711, %v760
    %vm763 = vcmask 1043459
    %v764 = vsel %vm763, %v718, %v762
    %vm765 = vcmask 1044484
    %v766 = vsel %vm765, %v725, %v764
    %vm767 = vcmask 1045509
    %v768 = vsel %vm767, %v732, %v766
    %vm769 = vcmask 1046534
    %v770 = vsel %vm769, %v739, %v768
    %vm771 = vcmask 1047559
    %v772 = vsel %vm771, %v746, %v770
    %v773 = vsel %vm690, %v772, 0
    %775 = vmatprep.subr.mxu0 0.0
    %776 = vmatpush1.msra.mxu0 0.0
    %777 = vmatprep.subr.mxu0 0.0
    %778 = vmatpush1.msra.mxu0 0.0
    %779 = vmatprep.subr.mxu0 0.0
    %780 = vmatpush1.msra.mxu0 0.0
    %781 = vmatprep.subr.mxu0 0.0
    %782 = vmatpush1.msra.mxu0 0.0
    %783 = vmatprep.subr.mxu0 0.0
    %784 = vmatpush1.msra.mxu0 0.0
    %785 = vmatprep.subr.mxu0 0.0
    %786 = vmatpush1.msra.mxu0 0.0
    %787 = vmatprep.subr.mxu0 0.0
    %788 = vmatpush1.msra.mxu0 0.0
    %789 = vmatprep.subr.mxu0 0.0
    %790 = vmatpush1.msra.mxu0 0.0
    %791 = vmatprep.subr.mxu0 0.0
    %792 = vmatpush1.msra.mxu0 0.0
    %793 = vmatprep.subr.mxu0 0.0
    %794 = vmatpush1.msra.mxu0 0.0
    %795 = vmatprep.subr.mxu0 0.0
    %796 = vmatpush1.msra.mxu0 0.0
    %797 = vmatprep.subr.mxu0 0.0
    %798 = vmatpush1.msra.mxu0 0.0
    %799 = vmatprep.subr.mxu0 0.0
    %800 = vmatpush1.msra.mxu0 %v750
    %801 = vmatprep.subr.mxu0 0.0
    %802 = vmatpush1.msra.mxu0 %v749
    %803 = vmatprep.subr.mxu0 0.0
    %804 = vmatpush1.msra.mxu0 %v748
    %805 = vmatprep.subr.mxu0 0.0
    %806 = vmatpush1.msra.mxu0 %v747
    %807 = vmatprep.subr.mxu0 0.0
    %808 = vmatpush2.msra.mxu0 0.0
    %809 = vmatprep.subr.mxu0 0.0
    %810 = vmatpush2.msra.mxu0 0.0
    %811 = vmatprep.subr.mxu0 0.0
    %812 = vmatpush2.msra.mxu0 0.0
    %813 = vmatprep.subr.mxu0 0.0
    %814 = vmatpush2.msra.mxu0 0.0
    %815 = vmatprep.subr.mxu0 0.0
    %816 = vmatpush2.msra.mxu0 0.0
    %817 = vmatprep.subr.mxu0 0.0
    %818 = vmatpush2.msra.mxu0 0.0
    %819 = vmatprep.subr.mxu0 0.0
    %820 = vmatpush2.msra.mxu0 0.0
    %821 = vmatprep.subr.mxu0 0.0
    %822 = vmatpush2.msra.mxu0 0.0
    %823 = vmatprep.subr.mxu0 0.0
    %824 = vmatpush2.msra.mxu0 0.0
    %825 = vmatprep.subr.mxu0 0.0
    %826 = vmatpush2.msra.mxu0 0.0
    %827 = vmatprep.subr.mxu0 0.0
    %828 = vmatpush2.msra.mxu0 0.0
    %829 = vmatprep.subr.mxu0 0.0
    %830 = vmatpush2.msra.mxu0 0.0
    %831 = vmatprep.subr.mxu0 0.0
    %832 = vmatpush2.msra.mxu0 0.0
    %833 = vmatprep.subr.mxu0 0.0
    %834 = vmatpush2.msra.mxu0 0.0
    %835 = vmatprep.subr.mxu0 0.0
    %836 = vmatpush2.msra.mxu0 0.0
    %837 = vmatprep.subr.mxu0 0.0
    %838 = vmatpush2.msra.mxu0 0.0
    %839 = vmatprep.mubr.f32.mxu0 0.0
    %840 = vmatmul.mubr.f32.gmra.mxu0 %v773
    %v841 = vpop.f32.mrf.mxu0
    %v842 = vadd.f32 0.0, %v841
    %v843 = vpop.f32.mrf.mxu0
    %844 = vdwg.mxu0
    %845 = vst [vmem:[#allocation2] sm:$0xff] %v842
    // Predicated region
    $region22: #{tpu_custom_call.1} parent=1 // pred_check
      _
    $region23: #{tpu_custom_call.1} parent=1 // pred_check_branch
      %847 = sbr.rel (0) target = $region25
    $region24: #{tpu_custom_call.1} parent=1 // pred_region
      %s849 = ssub.s32 128, 128
      %850 = vsyncadd [#allocation3], %s849
      %s852 = sshll.u32 [#allocation2], 4
      %s853 = int_to_ptr.vmem [resolvable:$true] %s852
      %855 = dma.vmem_to_hbm [thread:$0]  %s853, 128, %s5, [#allocation3]
    $region25: #{tpu_custom_call.1} parent=1 // pred_fallthru
      _
    // Predicated region
    $region26: #{tpu_custom_call.1} parent=1 // pred_check
      _
    $region27: #{tpu_custom_call.1} parent=1 // pred_check_branch
      %857 = sbr.rel (0) target = $region29
    $region28: #{tpu_custom_call.1} parent=1 // pred_region
      %858 = dma.done [#allocation3], 128
    $region29: #{tpu_custom_call.1} parent=1 // pred_fallthru
      _
    %859 = vsyncpa [#allocation3], 1

</llo_original>
